<compile_context>
chip_gen: v6e
topology: v6e:2x2x1
jax: 0.10.0
libtpu: 0.0.40
codegen_flags: <defaults>
</compile_context>

<pallas_src>
import functools

import jax
import jax.numpy as jnp
from jax.experimental import pallas as pl
from jax.experimental.pallas import tpu as pltpu


def _round_up(x: int, m: int) -> int:
    return (x + m - 1) // m * m


def _leaky_kernel(x_ref, w_ref, b_ref, mask_ref, o_ref, *,
                  beta: float, threshold: float, batch: int, time_steps: int):
    # x_ref:    (T*B, K_pad)  time-major rows (row t*B + b  ==  x[b, t, :])
    # w_ref:    (K_pad, N_pad)
    # b_ref:    (1, N_pad)
    # mask_ref: (1, N_pad)    1.0 for real classes, 0.0 for lane padding
    # o_ref:    (B, N_pad)
    x = x_ref[...]
    w = w_ref[...]
    b = b_ref[...]
    mask = mask_ref[...]

    # Hot path 1: the Linear layer for all time steps at once (single MXU matmul,
    # lane-dense N_pad columns, f32 accumulation).
    cur = jnp.dot(x, w, preferred_element_type=jnp.float32) + b   # (T*B, N_pad)

    n_pad = cur.shape[1]
    mem = jnp.zeros((batch, n_pad), jnp.float32)
    spk_sum = jnp.zeros((batch, n_pad), jnp.float32)

    # Hot path 2: LIF recurrence, statically unrolled over the small T.
    # Time-major rows => each step is a contiguous static row slice of `cur`.
    for t in range(time_steps):
        c_t = cur[t * batch:(t + 1) * batch, :]
        reset = (mem > threshold).astype(jnp.float32)
        mem = beta * mem + c_t - reset * threshold
        spk = (mem > threshold).astype(jnp.float32)
        spk_sum = spk_sum + spk

    # Hot path 3: softmax over the real class lanes.  spk_sum ∈ [0, T] so the
    # max-subtraction is unnecessary (no XLU max reduction); padded lanes have
    # spk_sum == 0 and are zeroed by the mask so they don't touch the denominator.
    e = jnp.exp(spk_sum) * mask
    denom = jnp.sum(e, axis=1, keepdims=True)
    o_ref[...] = e * pl.reciprocal(denom, approx=True)


def leaky_one_layer_forward(x, weight, bias, *, beta=0.1, threshold=1.0):
    """x: [B, T, N_in]; weight: [N_out, N_in] (PyTorch layout); bias: [N_out]."""
    B, T, n_in = x.shape
    n_out = weight.shape[0]
    k_pad = _round_up(n_in, 128)                 # 784 -> 896
    n_pad = _round_up(max(n_out, 128), 128)      # 10  -> 128 (lane-dense)

    # Layout plumbing in the wrapper (free XLA ops, nothing materializes in-kernel):
    # time-major 2D x, zero-padded K, lane-dense zero-padded class axis.
    x2d = jnp.transpose(x.astype(jnp.float32), (1, 0, 2)).reshape(T * B, n_in)
    x2d = jnp.pad(x2d, ((0, 0), (0, k_pad - n_in)))
    w_t = jnp.pad(weight.T.astype(jnp.float32),
                  ((0, k_pad - n_in), (0, n_pad - n_out)))
    b2 = jnp.pad(bias.astype(jnp.float32).reshape(1, n_out),
                 ((0, 0), (0, n_pad - n_out)))
    cls_mask = jnp.pad(jnp.ones((1, n_out), jnp.float32),
                       ((0, 0), (0, n_pad - n_out)))

    kernel = functools.partial(_leaky_kernel, beta=beta, threshold=threshold,
                               batch=B, time_steps=T)
    vmem = pltpu.MemorySpace.VMEM
    bytes_accessed = 4 * (x2d.size + w_t.size + b2.size + cls_mask.size + B * n_pad)

    y_pad = pl.pallas_call(
        kernel,
        out_shape=jax.ShapeDtypeStruct((B, n_pad), jnp.float32),
        in_specs=[
            pl.BlockSpec(memory_space=vmem),   # x (time-major 2D, whole array in VMEM)
            pl.BlockSpec(memory_space=vmem),   # W^T (padded)
            pl.BlockSpec(memory_space=vmem),   # bias (padded)
            pl.BlockSpec(memory_space=vmem),   # class mask
        ],
        out_specs=pl.BlockSpec(memory_space=vmem),
        cost_estimate=pl.CostEstimate(
            flops=2 * B * T * k_pad * n_pad,
            transcendentals=B * n_pad + B,
            bytes_accessed=bytes_accessed),
    )(x2d, w_t, b2, cls_mask)

    # Slice the real classes off in the wrapper (output stays lane-dense in-kernel).
    return y_pad[:, :n_out]


def _reference_forward(x, weight, bias, *, beta=0.1, threshold=1.0):
    """Pure-JAX reference of the PyTorch forward (for sanity checking)."""
    B, T, _ = x.shape
    n_out = weight.shape[0]
    mem = jnp.zeros((B, n_out), jnp.float32)
    spk_sum = jnp.zeros((B, n_out), jnp.float32)
    for t in range(T):
        cur = x[:, t, :] @ weight.T + bias
        reset = (mem > threshold).astype(jnp.float32)
        mem = beta * mem + cur - reset * threshold
        spk = (mem > threshold).astype(jnp.float32)
        spk_sum = spk_sum + spk
    return jax.nn.softmax(spk_sum, axis=1)


if __name__ == "__main__":
    # Module defaults: num_inputs = 28*28 = 784, num_outputs = 10,
    # beta = 0.1 (fixed in LeakyOneLayer_NoBetaEvolution), threshold = 1.0.
    B, T, N_IN, N_OUT = 2, 8, 784, 10
    BETA, THRESHOLD = 0.1, 1.0

    key = jax.random.PRNGKey(0)
    kx, kw, kb = jax.random.split(key, 3)

    # Deterministic parameter init (PyTorch nn.Linear default: U(-1/sqrt(fan_in), +)).
    bound = 1.0 / (N_IN ** 0.5)
    weight = jax.random.uniform(kw, (N_OUT, N_IN), jnp.float32, -bound, bound)
    bias = jax.random.uniform(kb, (N_OUT,), jnp.float32, -bound, bound)

    # Input spikes-like data: [B, T, N_in]
    x = jax.random.uniform(kx, (B, T, N_IN), jnp.float32)

    y = leaky_one_layer_forward(x, weight, bias, beta=BETA, threshold=THRESHOLD)
    y = jax.block_until_ready(y)

    y_ref = _reference_forward(x, weight, bias, beta=BETA, threshold=THRESHOLD)
    assert y.shape == (B, N_OUT)
    # Slightly looser tolerance: the softmax divide uses the EUP approx reciprocal.
    assert jnp.allclose(y, y_ref, atol=2e-3), (y, y_ref)

    print("KERNEL_OK")
</pallas_src>

<mosaic_0001>
module attributes {stable_mosaic.version = 11 : i64} {
  func.func @_leaky_kernel(%arg0: memref<16x896xf32, #tpu.memory_space<vmem>>, %arg1: memref<896x128xf32, #tpu.memory_space<vmem>>, %arg2: memref<1x128xf32, #tpu.memory_space<vmem>>, %arg3: memref<1x128xf32, #tpu.memory_space<vmem>>, %arg4: memref<2x128xf32, #tpu.memory_space<vmem>>) attributes {dimension_semantics = [], scalar_prefetch = 0 : i64, scratch_operands = 0 : i64, tpu.core_type = #tpu.core_type<tc>} {
    %c0 = arith.constant 0 : index
    %c0_0 = arith.constant 0 : index
    %0 = vector.load %arg0[%c0, %c0_0] : memref<16x896xf32, #tpu.memory_space<vmem>>, vector<16x896xf32>
    %c0_1 = arith.constant 0 : index
    %c0_2 = arith.constant 0 : index
    %1 = vector.load %arg1[%c0_1, %c0_2] : memref<896x128xf32, #tpu.memory_space<vmem>>, vector<896x128xf32>
    %c0_3 = arith.constant 0 : index
    %c0_4 = arith.constant 0 : index
    %2 = vector.load %arg2[%c0_3, %c0_4] : memref<1x128xf32, #tpu.memory_space<vmem>>, vector<1x128xf32>
    %c0_5 = arith.constant 0 : index
    %c0_6 = arith.constant 0 : index
    %3 = vector.load %arg3[%c0_5, %c0_6] : memref<1x128xf32, #tpu.memory_space<vmem>>, vector<1x128xf32>
    %cst = arith.constant dense<0.000000e+00> : vector<16x128xf32>
    %4 = tpu.matmul %0, %1, %cst {dimension_numbers = #tpu.dot_dimension_numbers<[1], [0], [0], [1], [0, 0, 1, 1], [], []>} : vector<16x896xf32>, vector<896x128xf32>, vector<16x128xf32> -> vector<16x128xf32>
    %5 = vector.broadcast %2 : vector<1x128xf32> to vector<16x128xf32>
    %6 = arith.addf %4, %5 : vector<16x128xf32>
    %cst_7 = arith.constant 0.000000e+00 : f32
    %7 = vector.broadcast %cst_7 : f32 to vector<2x128xf32>
    %cst_8 = arith.constant 0.000000e+00 : f32
    %8 = vector.broadcast %cst_8 : f32 to vector<2x128xf32>
    %9 = vector.extract_strided_slice %6 {offsets = [0, 0], sizes = [2, 128], strides = [1, 1]} : vector<16x128xf32> to vector<2x128xf32>
    %cst_9 = arith.constant 1.000000e+00 : f32
    %10 = vector.broadcast %cst_9 : f32 to vector<2x128xf32>
    %11 = arith.cmpf ogt, %7, %10 : vector<2x128xf32>
    %12 = arith.extui %11 : vector<2x128xi1> to vector<2x128xi32>
    %13 = arith.sitofp %12 : vector<2x128xi32> to vector<2x128xf32>
    %cst_10 = arith.constant 1.000000e-01 : f32
    %14 = vector.broadcast %cst_10 : f32 to vector<2x128xf32>
    %15 = arith.mulf %14, %7 : vector<2x128xf32>
    %16 = arith.addf %15, %9 : vector<2x128xf32>
    %cst_11 = arith.constant 1.000000e+00 : f32
    %17 = vector.broadcast %cst_11 : f32 to vector<2x128xf32>
    %18 = arith.mulf %13, %17 : vector<2x128xf32>
    %19 = arith.subf %16, %18 : vector<2x128xf32>
    %cst_12 = arith.constant 1.000000e+00 : f32
    %20 = vector.broadcast %cst_12 : f32 to vector<2x128xf32>
    %21 = arith.cmpf ogt, %19, %20 : vector<2x128xf32>
    %22 = arith.extui %21 : vector<2x128xi1> to vector<2x128xi32>
    %23 = arith.sitofp %22 : vector<2x128xi32> to vector<2x128xf32>
    %24 = arith.addf %8, %23 : vector<2x128xf32>
    %25 = vector.extract_strided_slice %6 {offsets = [2, 0], sizes = [2, 128], strides = [1, 1]} : vector<16x128xf32> to vector<2x128xf32>
    %cst_13 = arith.constant 1.000000e+00 : f32
    %26 = vector.broadcast %cst_13 : f32 to vector<2x128xf32>
    %27 = arith.cmpf ogt, %19, %26 : vector<2x128xf32>
    %28 = arith.extui %27 : vector<2x128xi1> to vector<2x128xi32>
    %29 = arith.sitofp %28 : vector<2x128xi32> to vector<2x128xf32>
    %cst_14 = arith.constant 1.000000e-01 : f32
    %30 = vector.broadcast %cst_14 : f32 to vector<2x128xf32>
    %31 = arith.mulf %30, %19 : vector<2x128xf32>
    %32 = arith.addf %31, %25 : vector<2x128xf32>
    %cst_15 = arith.constant 1.000000e+00 : f32
    %33 = vector.broadcast %cst_15 : f32 to vector<2x128xf32>
    %34 = arith.mulf %29, %33 : vector<2x128xf32>
    %35 = arith.subf %32, %34 : vector<2x128xf32>
    %cst_16 = arith.constant 1.000000e+00 : f32
    %36 = vector.broadcast %cst_16 : f32 to vector<2x128xf32>
    %37 = arith.cmpf ogt, %35, %36 : vector<2x128xf32>
    %38 = arith.extui %37 : vector<2x128xi1> to vector<2x128xi32>
    %39 = arith.sitofp %38 : vector<2x128xi32> to vector<2x128xf32>
    %40 = arith.addf %24, %39 : vector<2x128xf32>
    %41 = vector.extract_strided_slice %6 {offsets = [4, 0], sizes = [2, 128], strides = [1, 1]} : vector<16x128xf32> to vector<2x128xf32>
    %cst_17 = arith.constant 1.000000e+00 : f32
    %42 = vector.broadcast %cst_17 : f32 to vector<2x128xf32>
    %43 = arith.cmpf ogt, %35, %42 : vector<2x128xf32>
    %44 = arith.extui %43 : vector<2x128xi1> to vector<2x128xi32>
    %45 = arith.sitofp %44 : vector<2x128xi32> to vector<2x128xf32>
    %cst_18 = arith.constant 1.000000e-01 : f32
    %46 = vector.broadcast %cst_18 : f32 to vector<2x128xf32>
    %47 = arith.mulf %46, %35 : vector<2x128xf32>
    %48 = arith.addf %47, %41 : vector<2x128xf32>
    %cst_19 = arith.constant 1.000000e+00 : f32
    %49 = vector.broadcast %cst_19 : f32 to vector<2x128xf32>
    %50 = arith.mulf %45, %49 : vector<2x128xf32>
    %51 = arith.subf %48, %50 : vector<2x128xf32>
    %cst_20 = arith.constant 1.000000e+00 : f32
    %52 = vector.broadcast %cst_20 : f32 to vector<2x128xf32>
    %53 = arith.cmpf ogt, %51, %52 : vector<2x128xf32>
    %54 = arith.extui %53 : vector<2x128xi1> to vector<2x128xi32>
    %55 = arith.sitofp %54 : vector<2x128xi32> to vector<2x128xf32>
    %56 = arith.addf %40, %55 : vector<2x128xf32>
    %57 = vector.extract_strided_slice %6 {offsets = [6, 0], sizes = [2, 128], strides = [1, 1]} : vector<16x128xf32> to vector<2x128xf32>
    %cst_21 = arith.constant 1.000000e+00 : f32
    %58 = vector.broadcast %cst_21 : f32 to vector<2x128xf32>
    %59 = arith.cmpf ogt, %51, %58 : vector<2x128xf32>
    %60 = arith.extui %59 : vector<2x128xi1> to vector<2x128xi32>
    %61 = arith.sitofp %60 : vector<2x128xi32> to vector<2x128xf32>
    %cst_22 = arith.constant 1.000000e-01 : f32
    %62 = vector.broadcast %cst_22 : f32 to vector<2x128xf32>
    %63 = arith.mulf %62, %51 : vector<2x128xf32>
    %64 = arith.addf %63, %57 : vector<2x128xf32>
    %cst_23 = arith.constant 1.000000e+00 : f32
    %65 = vector.broadcast %cst_23 : f32 to vector<2x128xf32>
    %66 = arith.mulf %61, %65 : vector<2x128xf32>
    %67 = arith.subf %64, %66 : vector<2x128xf32>
    %cst_24 = arith.constant 1.000000e+00 : f32
    %68 = vector.broadcast %cst_24 : f32 to vector<2x128xf32>
    %69 = arith.cmpf ogt, %67, %68 : vector<2x128xf32>
    %70 = arith.extui %69 : vector<2x128xi1> to vector<2x128xi32>
    %71 = arith.sitofp %70 : vector<2x128xi32> to vector<2x128xf32>
    %72 = arith.addf %56, %71 : vector<2x128xf32>
    %73 = vector.extract_strided_slice %6 {offsets = [8, 0], sizes = [2, 128], strides = [1, 1]} : vector<16x128xf32> to vector<2x128xf32>
    %cst_25 = arith.constant 1.000000e+00 : f32
    %74 = vector.broadcast %cst_25 : f32 to vector<2x128xf32>
    %75 = arith.cmpf ogt, %67, %74 : vector<2x128xf32>
    %76 = arith.extui %75 : vector<2x128xi1> to vector<2x128xi32>
    %77 = arith.sitofp %76 : vector<2x128xi32> to vector<2x128xf32>
    %cst_26 = arith.constant 1.000000e-01 : f32
    %78 = vector.broadcast %cst_26 : f32 to vector<2x128xf32>
    %79 = arith.mulf %78, %67 : vector<2x128xf32>
    %80 = arith.addf %79, %73 : vector<2x128xf32>
    %cst_27 = arith.constant 1.000000e+00 : f32
    %81 = vector.broadcast %cst_27 : f32 to vector<2x128xf32>
    %82 = arith.mulf %77, %81 : vector<2x128xf32>
    %83 = arith.subf %80, %82 : vector<2x128xf32>
    %cst_28 = arith.constant 1.000000e+00 : f32
    %84 = vector.broadcast %cst_28 : f32 to vector<2x128xf32>
    %85 = arith.cmpf ogt, %83, %84 : vector<2x128xf32>
    %86 = arith.extui %85 : vector<2x128xi1> to vector<2x128xi32>
    %87 = arith.sitofp %86 : vector<2x128xi32> to vector<2x128xf32>
    %88 = arith.addf %72, %87 : vector<2x128xf32>
    %89 = vector.extract_strided_slice %6 {offsets = [10, 0], sizes = [2, 128], strides = [1, 1]} : vector<16x128xf32> to vector<2x128xf32>
    %cst_29 = arith.constant 1.000000e+00 : f32
    %90 = vector.broadcast %cst_29 : f32 to vector<2x128xf32>
    %91 = arith.cmpf ogt, %83, %90 : vector<2x128xf32>
    %92 = arith.extui %91 : vector<2x128xi1> to vector<2x128xi32>
    %93 = arith.sitofp %92 : vector<2x128xi32> to vector<2x128xf32>
    %cst_30 = arith.constant 1.000000e-01 : f32
    %94 = vector.broadcast %cst_30 : f32 to vector<2x128xf32>
    %95 = arith.mulf %94, %83 : vector<2x128xf32>
    %96 = arith.addf %95, %89 : vector<2x128xf32>
    %cst_31 = arith.constant 1.000000e+00 : f32
    %97 = vector.broadcast %cst_31 : f32 to vector<2x128xf32>
    %98 = arith.mulf %93, %97 : vector<2x128xf32>
    %99 = arith.subf %96, %98 : vector<2x128xf32>
    %cst_32 = arith.constant 1.000000e+00 : f32
    %100 = vector.broadcast %cst_32 : f32 to vector<2x128xf32>
    %101 = arith.cmpf ogt, %99, %100 : vector<2x128xf32>
    %102 = arith.extui %101 : vector<2x128xi1> to vector<2x128xi32>
    %103 = arith.sitofp %102 : vector<2x128xi32> to vector<2x128xf32>
    %104 = arith.addf %88, %103 : vector<2x128xf32>
    %105 = vector.extract_strided_slice %6 {offsets = [12, 0], sizes = [2, 128], strides = [1, 1]} : vector<16x128xf32> to vector<2x128xf32>
    %cst_33 = arith.constant 1.000000e+00 : f32
    %106 = vector.broadcast %cst_33 : f32 to vector<2x128xf32>
    %107 = arith.cmpf ogt, %99, %106 : vector<2x128xf32>
    %108 = arith.extui %107 : vector<2x128xi1> to vector<2x128xi32>
    %109 = arith.sitofp %108 : vector<2x128xi32> to vector<2x128xf32>
    %cst_34 = arith.constant 1.000000e-01 : f32
    %110 = vector.broadcast %cst_34 : f32 to vector<2x128xf32>
    %111 = arith.mulf %110, %99 : vector<2x128xf32>
    %112 = arith.addf %111, %105 : vector<2x128xf32>
    %cst_35 = arith.constant 1.000000e+00 : f32
    %113 = vector.broadcast %cst_35 : f32 to vector<2x128xf32>
    %114 = arith.mulf %109, %113 : vector<2x128xf32>
    %115 = arith.subf %112, %114 : vector<2x128xf32>
    %cst_36 = arith.constant 1.000000e+00 : f32
    %116 = vector.broadcast %cst_36 : f32 to vector<2x128xf32>
    %117 = arith.cmpf ogt, %115, %116 : vector<2x128xf32>
    %118 = arith.extui %117 : vector<2x128xi1> to vector<2x128xi32>
    %119 = arith.sitofp %118 : vector<2x128xi32> to vector<2x128xf32>
    %120 = arith.addf %104, %119 : vector<2x128xf32>
    %121 = vector.extract_strided_slice %6 {offsets = [14, 0], sizes = [2, 128], strides = [1, 1]} : vector<16x128xf32> to vector<2x128xf32>
    %cst_37 = arith.constant 1.000000e+00 : f32
    %122 = vector.broadcast %cst_37 : f32 to vector<2x128xf32>
    %123 = arith.cmpf ogt, %115, %122 : vector<2x128xf32>
    %124 = arith.extui %123 : vector<2x128xi1> to vector<2x128xi32>
    %125 = arith.sitofp %124 : vector<2x128xi32> to vector<2x128xf32>
    %cst_38 = arith.constant 1.000000e-01 : f32
    %126 = vector.broadcast %cst_38 : f32 to vector<2x128xf32>
    %127 = arith.mulf %126, %115 : vector<2x128xf32>
    %128 = arith.addf %127, %121 : vector<2x128xf32>
    %cst_39 = arith.constant 1.000000e+00 : f32
    %129 = vector.broadcast %cst_39 : f32 to vector<2x128xf32>
    %130 = arith.mulf %125, %129 : vector<2x128xf32>
    %131 = arith.subf %128, %130 : vector<2x128xf32>
    %cst_40 = arith.constant 1.000000e+00 : f32
    %132 = vector.broadcast %cst_40 : f32 to vector<2x128xf32>
    %133 = arith.cmpf ogt, %131, %132 : vector<2x128xf32>
    %134 = arith.extui %133 : vector<2x128xi1> to vector<2x128xi32>
    %135 = arith.sitofp %134 : vector<2x128xi32> to vector<2x128xf32>
    %136 = arith.addf %120, %135 : vector<2x128xf32>
    %137 = math.exp %136 : vector<2x128xf32>
    %138 = vector.broadcast %3 : vector<1x128xf32> to vector<2x128xf32>
    %139 = arith.mulf %137, %138 : vector<2x128xf32>
    %cst_41 = arith.constant dense<0.000000e+00> : vector<2xf32>
    %140 = vector.multi_reduction <add>, %139, %cst_41 [1] : vector<2x128xf32> to vector<2xf32>
    %141 = vector.shape_cast %140 : vector<2xf32> to vector<2x1xf32>
    %142 = tpu.reciprocal %141 {approx = true} : vector<2x1xf32> -> vector<2x1xf32>
    %143 = vector.broadcast %142 : vector<2x1xf32> to vector<2x128xf32>
    %144 = arith.mulf %139, %143 : vector<2x128xf32>
    %c0_42 = arith.constant 0 : index
    %c0_43 = arith.constant 0 : index
    %145 = vector.load %arg4[%c0_42, %c0_43] : memref<2x128xf32, #tpu.memory_space<vmem>>, vector<2x128xf32>
    tpu.vector_store %arg4[%c0_42, %c0_43], %144 {strides = array<i32>} : memref<2x128xf32, #tpu.memory_space<vmem>>, vector<2x128xf32>,
    return
  }
}

</mosaic_0001>

<llo_original>
// kernel: tpu_custom_call.1
$region0: #{tpu_custom_call.1}
  #allocation0 [shape = 'u32[]', space=smem, size = 0x4, offset = 0x4, fixed_abs, tag = 'smem constant byte address 0x4 - core index']
  #allocation1 [shape = 'u32[144,128]{1,0:T(1,128)}', space=vmem, size = 0x12000, scoped, tag = 'internal scratch']
  %s0 = inlined_call_operand.hbm [shape: f32[16,896], index: 0, kind: input, shape index: {}]
  %s1 = inlined_call_operand.hbm [shape: f32[896,128], index: 1, kind: input, shape index: {}]
  %s2 = inlined_call_operand.vmem [shape: f32[1,128], index: 2, kind: input, shape index: {}]
  %s3 = inlined_call_operand.vmem [shape: f32[1,128], index: 3, kind: input, shape index: {}]
  %s4 = inlined_call_operand.hbm [shape: f32[2,128], index: 4, kind: output, shape index: {}]
  %s5 = sld [smem:[#allocation0]]
  $region34: #{tpu_custom_call.1} parent=0
    _
  %s7 = ssub.s32 1, %s5
  %s8 = scalar_select 0, %s7, %s5
  $region1: #{tpu_custom_call.1} parent=0
    #allocation2 [shape = 'u8[57344]{0}', space=vmem, size = 0xe000, scoped, tag = 'input window, operand 0, single buffered']
    #allocation3 [shape = 's32[1]{0}', space=sflag, size = 0x4, scoped, tag = 'scoped memory for tpu_custom_call.1']
    #allocation4 [shape = 's32[1]{0}', space=sflag, size = 0x4, scoped, tag = 'scoped memory for tpu_custom_call.1']
    #allocation5 [shape = 'u8[458752]{0}', space=vmem, size = 0x70000, scoped, tag = 'input window, operand 1, single buffered']
    #allocation6 [shape = 's32[1]{0}', space=sflag, size = 0x4, scoped, tag = 'scoped memory for tpu_custom_call.1']
    #allocation7 [shape = 'u8[1024]{0}', space=vmem, size = 0x400, scoped, tag = 'output window, operand 0, single buffered']
    %9 = vsyncpa [#allocation3], 0
    %10 = vsyncpa [#allocation6], 0
    %11 = vsyncpa [#allocation4], 0
    // Predicated region
    $region2: #{tpu_custom_call.1} parent=1 // pred_check
      _
    $region3: #{tpu_custom_call.1} parent=1 // pred_check_branch
      %13 = sbr.rel (0) target = $region5
    $region4: #{tpu_custom_call.1} parent=1 // pred_region
      %s15 = ssub.s32 1792, 1792
      %16 = vsyncadd [#allocation3], %s15
      %s17 = sshll.u32 [#allocation2], 4
      %s18 = int_to_ptr.vmem [resolvable:$true] %s17
      %23 = dma.hbm_to_vmem [thread:$0]  %s0, 1792, %s18, [#allocation3], 896, 896, 56
    $region5: #{tpu_custom_call.1} parent=1 // pred_fallthru
      _
    // Predicated region
    $region6: #{tpu_custom_call.1} parent=1 // pred_check
      _
    $region7: #{tpu_custom_call.1} parent=1 // pred_check_branch
      %25 = sbr.rel (0) target = $region9
    $region8: #{tpu_custom_call.1} parent=1 // pred_region
      %s27 = ssub.s32 14336, 14336
      %28 = vsyncadd [#allocation6], %s27
      %s29 = sshll.u32 [#allocation5], 4
      %s30 = int_to_ptr.vmem [resolvable:$true] %s29
      %35 = dma.hbm_to_vmem [thread:$0]  %s1, 14336, %s30, [#allocation6], 128, 128, 8
    $region9: #{tpu_custom_call.1} parent=1 // pred_fallthru
      _
    // Predicated region
    $region10: #{tpu_custom_call.1} parent=1 // pred_check
      _
    $region11: #{tpu_custom_call.1} parent=1 // pred_check_branch
      %37 = sbr.rel (0) target = $region13
    $region12: #{tpu_custom_call.1} parent=1 // pred_region
      _
    $region13: #{tpu_custom_call.1} parent=1 // pred_fallthru
      _
    // Predicated region
    $region14: #{tpu_custom_call.1} parent=1 // pred_check
      _
    $region15: #{tpu_custom_call.1} parent=1 // pred_check_branch
      %39 = sbr.rel (0) target = $region17
    $region16: #{tpu_custom_call.1} parent=1 // pred_region
      _
    $region17: #{tpu_custom_call.1} parent=1 // pred_fallthru
      _
    // Predicated region
    $region18: #{tpu_custom_call.1} parent=1 // pred_check
      _
    $region19: #{tpu_custom_call.1} parent=1 // pred_check_branch
      %41 = sbr.rel (0) target = $region21
    $region20: #{tpu_custom_call.1} parent=1 // pred_region
      %42 = dma.done [#allocation3], 1792
    $region21: #{tpu_custom_call.1} parent=1 // pred_fallthru
      _
    // Predicated region
    $region22: #{tpu_custom_call.1} parent=1 // pred_check
      _
    $region23: #{tpu_custom_call.1} parent=1 // pred_check_branch
      %44 = sbr.rel (0) target = $region25
    $region24: #{tpu_custom_call.1} parent=1 // pred_region
      %45 = dma.done [#allocation6], 14336
    $region25: #{tpu_custom_call.1} parent=1 // pred_fallthru
      _
    %v46 = vld [vmem:[#allocation2] sm:$0xff]
    %v47 = vld [vmem:[#allocation2 + $0x8] sm:$0xff]
    %v48 = vld [vmem:[#allocation2 + $0x10] sm:$0xff]
    %v49 = vld [vmem:[#allocation2 + $0x18] sm:$0xff]
    %v50 = vld [vmem:[#allocation2 + $0x20] sm:$0xff]
    %v51 = vld [vmem:[#allocation2 + $0x28] sm:$0xff]
    %v52 = vld [vmem:[#allocation2 + $0x30] sm:$0xff]
    %v53 = vld [vmem:[#allocation2 + $0x38] sm:$0xff]
    %v54 = vld [vmem:[#allocation2 + $0x40] sm:$0xff]
    %v55 = vld [vmem:[#allocation2 + $0x48] sm:$0xff]
    %v56 = vld [vmem:[#allocation2 + $0x50] sm:$0xff]
    %v57 = vld [vmem:[#allocation2 + $0x58] sm:$0xff]
    %v58 = vld [vmem:[#allocation2 + $0x60] sm:$0xff]
    %v59 = vld [vmem:[#allocation2 + $0x68] sm:$0xff]
    %v60 = vld [vmem:[#allocation5] sm:$0xff]
    %v61 = vld [vmem:[#allocation5 + $0x8] sm:$0xff]
    %v62 = vld [vmem:[#allocation5 + $0x10] sm:$0xff]
    %v63 = vld [vmem:[#allocation5 + $0x18] sm:$0xff]
    %v64 = vld [vmem:[#allocation5 + $0x20] sm:$0xff]
    %v65 = vld [vmem:[#allocation5 + $0x28] sm:$0xff]
    %v66 = vld [vmem:[#allocation5 + $0x30] sm:$0xff]
    %v67 = vld [vmem:[#allocation5 + $0x38] sm:$0xff]
    %v68 = vld [vmem:[#allocation5 + $0x40] sm:$0xff]
    %v69 = vld [vmem:[#allocation5 + $0x48] sm:$0xff]
    %v70 = vld [vmem:[#allocation5 + $0x50] sm:$0xff]
    %v71 = vld [vmem:[#allocation5 + $0x58] sm:$0xff]
    %v72 = vld [vmem:[#allocation5 + $0x60] sm:$0xff]
    %v73 = vld [vmem:[#allocation5 + $0x68] sm:$0xff]
    %v74 = vld [vmem:[#allocation5 + $0x70] sm:$0xff]
    %v75 = vld [vmem:[#allocation5 + $0x78] sm:$0xff]
    %v76 = vld [vmem:[#allocation5 + $0x80] sm:$0xff]
    %v77 = vld [vmem:[#allocation5 + $0x88] sm:$0xff]
    %v78 = vld [vmem:[#allocation5 + $0x90] sm:$0xff]
    %v79 = vld [vmem:[#allocation5 + $0x98] sm:$0xff]
    %v80 = vld [vmem:[#allocation5 + $0xa0] sm:$0xff]
    %v81 = vld [vmem:[#allocation5 + $0xa8] sm:$0xff]
    %v82 = vld [vmem:[#allocation5 + $0xb0] sm:$0xff]
    %v83 = vld [vmem:[#allocation5 + $0xb8] sm:$0xff]
    %v84 = vld [vmem:[#allocation5 + $0xc0] sm:$0xff]
    %v85 = vld [vmem:[#allocation5 + $0xc8] sm:$0xff]
    %v86 = vld [vmem:[#allocation5 + $0xd0] sm:$0xff]
    %v87 = vld [vmem:[#allocation5 + $0xd8] sm:$0xff]
    %v88 = vld [vmem:[#allocation5 + $0xe0] sm:$0xff]
    %v89 = vld [vmem:[#allocation5 + $0xe8] sm:$0xff]
    %v90 = vld [vmem:[#allocation5 + $0xf0] sm:$0xff]
    %v91 = vld [vmem:[#allocation5 + $0xf8] sm:$0xff]
    %v92 = vld [vmem:[#allocation5 + $0x100] sm:$0xff]
    %v93 = vld [vmem:[#allocation5 + $0x108] sm:$0xff]
    %v94 = vld [vmem:[#allocation5 + $0x110] sm:$0xff]
    %v95 = vld [vmem:[#allocation5 + $0x118] sm:$0xff]
    %v96 = vld [vmem:[#allocation5 + $0x120] sm:$0xff]
    %v97 = vld [vmem:[#allocation5 + $0x128] sm:$0xff]
    %v98 = vld [vmem:[#allocation5 + $0x130] sm:$0xff]
    %v99 = vld [vmem:[#allocation5 + $0x138] sm:$0xff]
    %v100 = vld [vmem:[#allocation5 + $0x140] sm:$0xff]
    %v101 = vld [vmem:[#allocation5 + $0x148] sm:$0xff]
    %v102 = vld [vmem:[#allocation5 + $0x150] sm:$0xff]
    %v103 = vld [vmem:[#allocation5 + $0x158] sm:$0xff]
    %v104 = vld [vmem:[#allocation5 + $0x160] sm:$0xff]
    %v105 = vld [vmem:[#allocation5 + $0x168] sm:$0xff]
    %v106 = vld [vmem:[#allocation5 + $0x170] sm:$0xff]
    %v107 = vld [vmem:[#allocation5 + $0x178] sm:$0xff]
    %v108 = vld [vmem:[#allocation5 + $0x180] sm:$0xff]
    %v109 = vld [vmem:[#allocation5 + $0x188] sm:$0xff]
    %v110 = vld [vmem:[#allocation5 + $0x190] sm:$0xff]
    %v111 = vld [vmem:[#allocation5 + $0x198] sm:$0xff]
    %v112 = vld [vmem:[#allocation5 + $0x1a0] sm:$0xff]
    %v113 = vld [vmem:[#allocation5 + $0x1a8] sm:$0xff]
    %v114 = vld [vmem:[#allocation5 + $0x1b0] sm:$0xff]
    %v115 = vld [vmem:[#allocation5 + $0x1b8] sm:$0xff]
    %v116 = vld [vmem:[#allocation5 + $0x1c0] sm:$0xff]
    %v117 = vld [vmem:[#allocation5 + $0x1c8] sm:$0xff]
    %v118 = vld [vmem:[#allocation5 + $0x1d0] sm:$0xff]
    %v119 = vld [vmem:[#allocation5 + $0x1d8] sm:$0xff]
    %v120 = vld [vmem:[#allocation5 + $0x1e0] sm:$0xff]
    %v121 = vld [vmem:[#allocation5 + $0x1e8] sm:$0xff]
    %v122 = vld [vmem:[#allocation5 + $0x1f0] sm:$0xff]
    %v123 = vld [vmem:[#allocation5 + $0x1f8] sm:$0xff]
    %v124 = vld [vmem:[#allocation5 + $0x200] sm:$0xff]
    %v125 = vld [vmem:[#allocation5 + $0x208] sm:$0xff]
    %v126 = vld [vmem:[#allocation5 + $0x210] sm:$0xff]
    %v127 = vld [vmem:[#allocation5 + $0x218] sm:$0xff]
    %v128 = vld [vmem:[#allocation5 + $0x220] sm:$0xff]
    %v129 = vld [vmem:[#allocation5 + $0x228] sm:$0xff]
    %v130 = vld [vmem:[#allocation5 + $0x230] sm:$0xff]
    %v131 = vld [vmem:[#allocation5 + $0x238] sm:$0xff]
    %v132 = vld [vmem:[#allocation5 + $0x240] sm:$0xff]
    %v133 = vld [vmem:[#allocation5 + $0x248] sm:$0xff]
    %v134 = vld [vmem:[#allocation5 + $0x250] sm:$0xff]
    %v135 = vld [vmem:[#allocation5 + $0x258] sm:$0xff]
    %v136 = vld [vmem:[#allocation5 + $0x260] sm:$0xff]
    %v137 = vld [vmem:[#allocation5 + $0x268] sm:$0xff]
    %v138 = vld [vmem:[#allocation5 + $0x270] sm:$0xff]
    %v139 = vld [vmem:[#allocation5 + $0x278] sm:$0xff]
    %v140 = vld [vmem:[#allocation5 + $0x280] sm:$0xff]
    %v141 = vld [vmem:[#allocation5 + $0x288] sm:$0xff]
    %v142 = vld [vmem:[#allocation5 + $0x290] sm:$0xff]
    %v143 = vld [vmem:[#allocation5 + $0x298] sm:$0xff]
    %v144 = vld [vmem:[#allocation5 + $0x2a0] sm:$0xff]
    %v145 = vld [vmem:[#allocation5 + $0x2a8] sm:$0xff]
    %v146 = vld [vmem:[#allocation5 + $0x2b0] sm:$0xff]
    %v147 = vld [vmem:[#allocation5 + $0x2b8] sm:$0xff]
    %v148 = vld [vmem:[#allocation5 + $0x2c0] sm:$0xff]
    %v149 = vld [vmem:[#allocation5 + $0x2c8] sm:$0xff]
    %v150 = vld [vmem:[#allocation5 + $0x2d0] sm:$0xff]
    %v151 = vld [vmem:[#allocation5 + $0x2d8] sm:$0xff]
    %v152 = vld [vmem:[#allocation5 + $0x2e0] sm:$0xff]
    %v153 = vld [vmem:[#allocation5 + $0x2e8] sm:$0xff]
    %v154 = vld [vmem:[#allocation5 + $0x2f0] sm:$0xff]
    %v155 = vld [vmem:[#allocation5 + $0x2f8] sm:$0xff]
    %v156 = vld [vmem:[#allocation5 + $0x300] sm:$0xff]
    %v157 = vld [vmem:[#allocation5 + $0x308] sm:$0xff]
    %v158 = vld [vmem:[#allocation5 + $0x310] sm:$0xff]
    %v159 = vld [vmem:[#allocation5 + $0x318] sm:$0xff]
    %v160 = vld [vmem:[#allocation5 + $0x320] sm:$0xff]
    %v161 = vld [vmem:[#allocation5 + $0x328] sm:$0xff]
    %v162 = vld [vmem:[#allocation5 + $0x330] sm:$0xff]
    %v163 = vld [vmem:[#allocation5 + $0x338] sm:$0xff]
    %v164 = vld [vmem:[#allocation5 + $0x340] sm:$0xff]
    %v165 = vld [vmem:[#allocation5 + $0x348] sm:$0xff]
    %v166 = vld [vmem:[#allocation5 + $0x350] sm:$0xff]
    %v167 = vld [vmem:[#allocation5 + $0x358] sm:$0xff]
    %v168 = vld [vmem:[#allocation5 + $0x360] sm:$0xff]
    %v169 = vld [vmem:[#allocation5 + $0x368] sm:$0xff]
    %v170 = vld [vmem:[#allocation5 + $0x370] sm:$0xff]
    %v171 = vld [vmem:[#allocation5 + $0x378] sm:$0xff]
    %v172 = vld [vmem:[%s2] sm:$0x1]
    %v173 = vld [vmem:[%s3] sm:$0x1]
    %v175 = vlaneseq
    %v176 = vshrl.u32 %v175, 7
    %v177 = vsub.s32 0, %v176
    %v178 = vrot.slane %v172, %v177
    %180 = vmatprep.subr.mxu0 0.0
    %181 = vmatpush1.msra.mxu0 %v75
    %182 = vmatprep.subr.mxu0 0.0
    %183 = vmatpush1.msra.mxu0 %v74
    %184 = vmatprep.subr.mxu0 0.0
    %185 = vmatpush1.msra.mxu0 %v73
    %186 = vmatprep.subr.mxu0 0.0
    %187 = vmatpush1.msra.mxu0 %v72
    %188 = vmatprep.subr.mxu0 0.0
    %189 = vmatpush1.msra.mxu0 %v71
    %190 = vmatprep.subr.mxu0 0.0
    %191 = vmatpush1.msra.mxu0 %v70
    %192 = vmatprep.subr.mxu0 0.0
    %193 = vmatpush1.msra.mxu0 %v69
    %194 = vmatprep.subr.mxu0 0.0
    %195 = vmatpush1.msra.mxu0 %v68
    %196 = vmatprep.subr.mxu0 0.0
    %197 = vmatpush1.msra.mxu0 %v67
    %198 = vmatprep.subr.mxu0 0.0
    %199 = vmatpush1.msra.mxu0 %v66
    %200 = vmatprep.subr.mxu0 0.0
    %201 = vmatpush1.msra.mxu0 %v65
    %202 = vmatprep.subr.mxu0 0.0
    %203 = vmatpush1.msra.mxu0 %v64
    %204 = vmatprep.subr.mxu0 0.0
    %205 = vmatpush1.msra.mxu0 %v63
    %206 = vmatprep.subr.mxu0 0.0
    %207 = vmatpush1.msra.mxu0 %v62
    %208 = vmatprep.subr.mxu0 0.0
    %209 = vmatpush1.msra.mxu0 %v61
    %210 = vmatprep.subr.mxu0 0.0
    %211 = vmatpush1.msra.mxu0 %v60
    %212 = vmatprep.subr.mxu0 0.0
    %213 = vmatpush2.msra.mxu0 %v91
    %214 = vmatprep.subr.mxu0 0.0
    %215 = vmatpush2.msra.mxu0 %v90
    %216 = vmatprep.subr.mxu0 0.0
    %217 = vmatpush2.msra.mxu0 %v89
    %218 = vmatprep.subr.mxu0 0.0
    %219 = vmatpush2.msra.mxu0 %v88
    %220 = vmatprep.subr.mxu0 0.0
    %221 = vmatpush2.msra.mxu0 %v87
    %222 = vmatprep.subr.mxu0 0.0
    %223 = vmatpush2.msra.mxu0 %v86
    %224 = vmatprep.subr.mxu0 0.0
    %225 = vmatpush2.msra.mxu0 %v85
    %226 = vmatprep.subr.mxu0 0.0
    %227 = vmatpush2.msra.mxu0 %v84
    %228 = vmatprep.subr.mxu0 0.0
    %229 = vmatpush2.msra.mxu0 %v83
    %230 = vmatprep.subr.mxu0 0.0
    %231 = vmatpush2.msra.mxu0 %v82
    %232 = vmatprep.subr.mxu0 0.0
    %233 = vmatpush2.msra.mxu0 %v81
    %234 = vmatprep.subr.mxu0 0.0
    %235 = vmatpush2.msra.mxu0 %v80
    %236 = vmatprep.subr.mxu0 0.0
    %237 = vmatpush2.msra.mxu0 %v79
    %238 = vmatprep.subr.mxu0 0.0
    %239 = vmatpush2.msra.mxu0 %v78
    %240 = vmatprep.subr.mxu0 0.0
    %241 = vmatpush2.msra.mxu0 %v77
    %242 = vmatprep.subr.mxu0 0.0
    %243 = vmatpush2.msra.mxu0 %v76
    %244 = vmatprep.mubr.f32.mxu0 %v47
    %245 = vmatmul.mubr.f32.gmra.mxu0 %v46
    %v246 = vpop.f32.mrf.mxu0
    %v247 = vadd.f32 %v178, %v246
    %v248 = vpop.f32.mrf.mxu0
    %249 = vmatprep.mubr.f32.mxu0 %v54
    %250 = vmatmul.mubr.f32.gmra.mxu0 %v53
    %v251 = vpop.f32.mrf.mxu0
    %v252 = vadd.f32 %v178, %v251
    %v253 = vpop.f32.mrf.mxu0
    %254 = vdwg.mxu0
    %255 = vmatprep.subr.mxu0 0.0
    %256 = vmatpush1.msra.mxu0 %v107
    %257 = vmatprep.subr.mxu0 0.0
    %258 = vmatpush1.msra.mxu0 %v106
    %259 = vmatprep.subr.mxu0 0.0
    %260 = vmatpush1.msra.mxu0 %v105
    %261 = vmatprep.subr.mxu0 0.0
    %262 = vmatpush1.msra.mxu0 %v104
    %263 = vmatprep.subr.mxu0 0.0
    %264 = vmatpush1.msra.mxu0 %v103
    %265 = vmatprep.subr.mxu0 0.0
    %266 = vmatpush1.msra.mxu0 %v102
    %267 = vmatprep.subr.mxu0 0.0
    %268 = vmatpush1.msra.mxu0 %v101
    %269 = vmatprep.subr.mxu0 0.0
    %270 = vmatpush1.msra.mxu0 %v100
    %271 = vmatprep.subr.mxu0 0.0
    %272 = vmatpush1.msra.mxu0 %v99
    %273 = vmatprep.subr.mxu0 0.0
    %274 = vmatpush1.msra.mxu0 %v98
    %275 = vmatprep.subr.mxu0 0.0
    %276 = vmatpush1.msra.mxu0 %v97
    %277 = vmatprep.subr.mxu0 0.0
    %278 = vmatpush1.msra.mxu0 %v96
    %279 = vmatprep.subr.mxu0 0.0
    %280 = vmatpush1.msra.mxu0 %v95
    %281 = vmatprep.subr.mxu0 0.0
    %282 = vmatpush1.msra.mxu0 %v94
    %283 = vmatprep.subr.mxu0 0.0
    %284 = vmatpush1.msra.mxu0 %v93
    %285 = vmatprep.subr.mxu0 0.0
    %286 = vmatpush1.msra.mxu0 %v92
    %287 = vmatprep.subr.mxu0 0.0
    %288 = vmatpush2.msra.mxu0 %v123
    %289 = vmatprep.subr.mxu0 0.0
    %290 = vmatpush2.msra.mxu0 %v122
    %291 = vmatprep.subr.mxu0 0.0
    %292 = vmatpush2.msra.mxu0 %v121
    %293 = vmatprep.subr.mxu0 0.0
    %294 = vmatpush2.msra.mxu0 %v120
    %295 = vmatprep.subr.mxu0 0.0
    %296 = vmatpush2.msra.mxu0 %v119
    %297 = vmatprep.subr.mxu0 0.0
    %298 = vmatpush2.msra.mxu0 %v118
    %299 = vmatprep.subr.mxu0 0.0
    %300 = vmatpush2.msra.mxu0 %v117
    %301 = vmatprep.subr.mxu0 0.0
    %302 = vmatpush2.msra.mxu0 %v116
    %303 = vmatprep.subr.mxu0 0.0
    %304 = vmatpush2.msra.mxu0 %v115
    %305 = vmatprep.subr.mxu0 0.0
    %306 = vmatpush2.msra.mxu0 %v114
    %307 = vmatprep.subr.mxu0 0.0
    %308 = vmatpush2.msra.mxu0 %v113
    %309 = vmatprep.subr.mxu0 0.0
    %310 = vmatpush2.msra.mxu0 %v112
    %311 = vmatprep.subr.mxu0 0.0
    %312 = vmatpush2.msra.mxu0 %v111
    %313 = vmatprep.subr.mxu0 0.0
    %314 = vmatpush2.msra.mxu0 %v110
    %315 = vmatprep.subr.mxu0 0.0
    %316 = vmatpush2.msra.mxu0 %v109
    %317 = vmatprep.subr.mxu0 0.0
    %318 = vmatpush2.msra.mxu0 %v108
    %319 = vmatprep.mubr.f32.mxu0 %v49
    %320 = vmatmul.mubr.f32.gmra.mxu0 %v48
    %v321 = vpop.f32.mrf.mxu0
    %v322 = vadd.f32 %v247, %v321
    %v323 = vpop.f32.mrf.mxu0
    %324 = vmatprep.mubr.f32.mxu0 %v56
    %325 = vmatmul.mubr.f32.gmra.mxu0 %v55
    %v326 = vpop.f32.mrf.mxu0
    %v327 = vadd.f32 %v252, %v326
    %v328 = vpop.f32.mrf.mxu0
    %329 = vdwg.mxu0
    %330 = vmatprep.subr.mxu0 0.0
    %331 = vmatpush1.msra.mxu0 %v139
    %332 = vmatprep.subr.mxu0 0.0
    %333 = vmatpush1.msra.mxu0 %v138
    %334 = vmatprep.subr.mxu0 0.0
    %335 = vmatpush1.msra.mxu0 %v137
    %336 = vmatprep.subr.mxu0 0.0
    %337 = vmatpush1.msra.mxu0 %v136
    %338 = vmatprep.subr.mxu0 0.0
    %339 = vmatpush1.msra.mxu0 %v135
    %340 = vmatprep.subr.mxu0 0.0
    %341 = vmatpush1.msra.mxu0 %v134
    %342 = vmatprep.subr.mxu0 0.0
    %343 = vmatpush1.msra.mxu0 %v133
    %344 = vmatprep.subr.mxu0 0.0
    %345 = vmatpush1.msra.mxu0 %v132
    %346 = vmatprep.subr.mxu0 0.0
    %347 = vmatpush1.msra.mxu0 %v131
    %348 = vmatprep.subr.mxu0 0.0
    %349 = vmatpush1.msra.mxu0 %v130
    %350 = vmatprep.subr.mxu0 0.0
    %351 = vmatpush1.msra.mxu0 %v129
    %352 = vmatprep.subr.mxu0 0.0
    %353 = vmatpush1.msra.mxu0 %v128
    %354 = vmatprep.subr.mxu0 0.0
    %355 = vmatpush1.msra.mxu0 %v127
    %356 = vmatprep.subr.mxu0 0.0
    %357 = vmatpush1.msra.mxu0 %v126
    %358 = vmatprep.subr.mxu0 0.0
    %359 = vmatpush1.msra.mxu0 %v125
    %360 = vmatprep.subr.mxu0 0.0
    %361 = vmatpush1.msra.mxu0 %v124
    %362 = vmatprep.subr.mxu0 0.0
    %363 = vmatpush2.msra.mxu0 %v155
    %364 = vmatprep.subr.mxu0 0.0
    %365 = vmatpush2.msra.mxu0 %v154
    %366 = vmatprep.subr.mxu0 0.0
    %367 = vmatpush2.msra.mxu0 %v153
    %368 = vmatprep.subr.mxu0 0.0
    %369 = vmatpush2.msra.mxu0 %v152
    %370 = vmatprep.subr.mxu0 0.0
    %371 = vmatpush2.msra.mxu0 %v151
    %372 = vmatprep.subr.mxu0 0.0
    %373 = vmatpush2.msra.mxu0 %v150
    %374 = vmatprep.subr.mxu0 0.0
    %375 = vmatpush2.msra.mxu0 %v149
    %376 = vmatprep.subr.mxu0 0.0
    %377 = vmatpush2.msra.mxu0 %v148
    %378 = vmatprep.subr.mxu0 0.0
    %379 = vmatpush2.msra.mxu0 %v147
    %380 = vmatprep.subr.mxu0 0.0
    %381 = vmatpush2.msra.mxu0 %v146
    %382 = vmatprep.subr.mxu0 0.0
    %383 = vmatpush2.msra.mxu0 %v145
    %384 = vmatprep.subr.mxu0 0.0
    %385 = vmatpush2.msra.mxu0 %v144
    %386 = vmatprep.subr.mxu0 0.0
    %387 = vmatpush2.msra.mxu0 %v143
    %388 = vmatprep.subr.mxu0 0.0
    %389 = vmatpush2.msra.mxu0 %v142
    %390 = vmatprep.subr.mxu0 0.0
    %391 = vmatpush2.msra.mxu0 %v141
    %392 = vmatprep.subr.mxu0 0.0
    %393 = vmatpush2.msra.mxu0 %v140
    %394 = vmatprep.mubr.f32.mxu0 %v51
    %395 = vmatmul.mubr.f32.gmra.mxu0 %v50
    %v396 = vpop.f32.mrf.mxu0
    %v397 = vadd.f32 %v322, %v396
    %v398 = vpop.f32.mrf.mxu0
    %399 = vmatprep.mubr.f32.mxu0 %v58
    %400 = vmatmul.mubr.f32.gmra.mxu0 %v57
    %v401 = vpop.f32.mrf.mxu0
    %v402 = vadd.f32 %v327, %v401
    %v403 = vpop.f32.mrf.mxu0
    %404 = vdwg.mxu0
    %405 = vmatprep.subr.mxu0 0.0
    %406 = vmatpush1.msra.mxu0 %v171
    %407 = vmatprep.subr.mxu0 0.0
    %408 = vmatpush1.msra.mxu0 %v170
    %409 = vmatprep.subr.mxu0 0.0
    %410 = vmatpush1.msra.mxu0 %v169
    %411 = vmatprep.subr.mxu0 0.0
    %412 = vmatpush1.msra.mxu0 %v168
    %413 = vmatprep.subr.mxu0 0.0
    %414 = vmatpush1.msra.mxu0 %v167
    %415 = vmatprep.subr.mxu0 0.0
    %416 = vmatpush1.msra.mxu0 %v166
    %417 = vmatprep.subr.mxu0 0.0
    %418 = vmatpush1.msra.mxu0 %v165
    %419 = vmatprep.subr.mxu0 0.0
    %420 = vmatpush1.msra.mxu0 %v164
    %421 = vmatprep.subr.mxu0 0.0
    %422 = vmatpush1.msra.mxu0 %v163
    %423 = vmatprep.subr.mxu0 0.0
    %424 = vmatpush1.msra.mxu0 %v162
    %425 = vmatprep.subr.mxu0 0.0
    %426 = vmatpush1.msra.mxu0 %v161
    %427 = vmatprep.subr.mxu0 0.0
    %428 = vmatpush1.msra.mxu0 %v160
    %429 = vmatprep.subr.mxu0 0.0
    %430 = vmatpush1.msra.mxu0 %v159
    %431 = vmatprep.subr.mxu0 0.0
    %432 = vmatpush1.msra.mxu0 %v158
    %433 = vmatprep.subr.mxu0 0.0
    %434 = vmatpush1.msra.mxu0 %v157
    %435 = vmatprep.subr.mxu0 0.0
    %436 = vmatpush1.msra.mxu0 %v156
    %437 = vmatprep.subr.mxu0 0.0
    %438 = vmatpush2.msra.mxu0 0.0
    %439 = vmatprep.subr.mxu0 0.0
    %440 = vmatpush2.msra.mxu0 0.0
    %441 = vmatprep.subr.mxu0 0.0
    %442 = vmatpush2.msra.mxu0 0.0
    %443 = vmatprep.subr.mxu0 0.0
    %444 = vmatpush2.msra.mxu0 0.0
    %445 = vmatprep.subr.mxu0 0.0
    %446 = vmatpush2.msra.mxu0 0.0
    %447 = vmatprep.subr.mxu0 0.0
    %448 = vmatpush2.msra.mxu0 0.0
    %449 = vmatprep.subr.mxu0 0.0
    %450 = vmatpush2.msra.mxu0 0.0
    %451 = vmatprep.subr.mxu0 0.0
    %452 = vmatpush2.msra.mxu0 0.0
    %453 = vmatprep.subr.mxu0 0.0
    %454 = vmatpush2.msra.mxu0 0.0
    %455 = vmatprep.subr.mxu0 0.0
    %456 = vmatpush2.msra.mxu0 0.0
    %457 = vmatprep.subr.mxu0 0.0
    %458 = vmatpush2.msra.mxu0 0.0
    %459 = vmatprep.subr.mxu0 0.0
    %460 = vmatpush2.msra.mxu0 0.0
    %461 = vmatprep.subr.mxu0 0.0
    %462 = vmatpush2.msra.mxu0 0.0
    %463 = vmatprep.subr.mxu0 0.0
    %464 = vmatpush2.msra.mxu0 0.0
    %465 = vmatprep.subr.mxu0 0.0
    %466 = vmatpush2.msra.mxu0 0.0
    %467 = vmatprep.subr.mxu0 0.0
    %468 = vmatpush2.msra.mxu0 0.0
    %469 = vmatprep.mubr.f32.mxu0 0.0
    %470 = vmatmul.mubr.f32.gmra.mxu0 %v52
    %v471 = vpop.f32.mrf.mxu0
    %v472 = vadd.f32 %v397, %v471
    %v473 = vpop.f32.mrf.mxu0
    %474 = vmatprep.mubr.f32.mxu0 0.0
    %475 = vmatmul.mubr.f32.gmra.mxu0 %v59
    %v476 = vpop.f32.mrf.mxu0
    %v477 = vadd.f32 %v402, %v476
    %v478 = vpop.f32.mrf.mxu0
    %479 = vdwg.mxu0
    %vm480 = vcmp.gt.f32.partialorder 0.0, 1.0
    %v481 = vsel %vm480, 1, 0
    %v482 = vcvt.s32.f32 %v481
    %v483 = vadd.f32 %v472, 0.0
    %v484 = vsub.f32 %v483, %v482
    %vm485 = vcmp.gt.f32.partialorder %v484, 1.0
    %v486 = vsel %vm485, 1, 0
    %v487 = vcvt.s32.f32 %v486
    %v488 = vadd.f32 %v487, 0.0
    %v489 = vmul.f32 %v484, 0.1
    %v491 = vrot.slane %v472, 2
    %v493 = vadd.f32 %v489, %v491
    %v494 = vsub.f32 %v493, %v487
    %vm495 = vcmp.gt.f32.partialorder %v494, 1.0
    %v496 = vsel %vm495, 1, 0
    %v497 = vcvt.s32.f32 %v496
    %v498 = vadd.f32 %v488, %v497
    %v499 = vmul.f32 %v494, 0.1
    %v500 = vrot.slane %v472, 4
    %v502 = vadd.f32 %v499, %v500
    %v503 = vsub.f32 %v502, %v497
    %vm504 = vcmp.gt.f32.partialorder %v503, 1.0
    %v505 = vsel %vm504, 1, 0
    %v506 = vcvt.s32.f32 %v505
    %v507 = vadd.f32 %v498, %v506
    %v508 = vmul.f32 %v503, 0.1
    %v509 = vrot.slane %v472, 6
    %v511 = vadd.f32 %v508, %v509
    %v512 = vsub.f32 %v511, %v506
    %vm513 = vcmp.gt.f32.partialorder %v512, 1.0
    %v514 = vsel %vm513, 1, 0
    %v515 = vcvt.s32.f32 %v514
    %v516 = vadd.f32 %v507, %v515
    %v517 = vmul.f32 %v512, 0.1
    %v518 = vadd.f32 %v517, %v477
    %v519 = vsub.f32 %v518, %v515
    %vm520 = vcmp.gt.f32.partialorder %v519, 1.0
    %v521 = vsel %vm520, 1, 0
    %v522 = vcvt.s32.f32 %v521
    %v523 = vadd.f32 %v516, %v522
    %v524 = vmul.f32 %v519, 0.1
    %v526 = vrot.slane %v477, 2
    %v528 = vadd.f32 %v524, %v526
    %v529 = vsub.f32 %v528, %v522
    %vm530 = vcmp.gt.f32.partialorder %v529, 1.0
    %v531 = vsel %vm530, 1, 0
    %v532 = vcvt.s32.f32 %v531
    %v533 = vadd.f32 %v523, %v532
    %v534 = vmul.f32 %v529, 0.1
    %v535 = vrot.slane %v477, 4
    %v537 = vadd.f32 %v534, %v535
    %v538 = vsub.f32 %v537, %v532
    %vm539 = vcmp.gt.f32.partialorder %v538, 1.0
    %v540 = vsel %vm539, 1, 0
    %v541 = vcvt.s32.f32 %v540
    %v542 = vadd.f32 %v533, %v541
    %v543 = vmul.f32 %v538, 0.1
    %v544 = vrot.slane %v477, 6
    %v546 = vadd.f32 %v543, %v544
    %v547 = vsub.f32 %v546, %v541
    %vm548 = vcmp.gt.f32.partialorder %v547, 1.0
    %v549 = vsel %vm548, 1, 0
    %v550 = vcvt.s32.f32 %v549
    %v551 = vadd.f32 %v542, %v550
    %v552 = vmul.f32 %v551, 1.442695
    %v553 = vpow.pop %v552
    %v555 = vlaneseq
    %v556 = vshrl.u32 %v555, 7
    %v557 = vsub.s32 0, %v556
    %v558 = vrot.slane %v173, %v557
    %v560 = vmul.f32 %v553, %v558
    %vm561 = vcmask 1041408
    %v562 = vsel %vm561, %v560, 0.0
    %563 = vadd.xlane.f32.xlu0 %v562
    %v564 = vpop.xlane.xlu0 %563
    %v565 = vrcp.pop %v564
    %v566 = vmul.f32 %v560, %v565
    %567 = vst [vmem:[#allocation7] sm:$0x3] %v566
    // Predicated region
    $region26: #{tpu_custom_call.1} parent=1 // pred_check
      _
    $region27: #{tpu_custom_call.1} parent=1 // pred_check_branch
      %569 = sbr.rel (0) target = $region29
    $region28: #{tpu_custom_call.1} parent=1 // pred_region
      %s571 = ssub.s32 32, 32
      %572 = vsyncadd [#allocation4], %s571
      %s574 = sshll.u32 [#allocation7], 4
      %s575 = int_to_ptr.vmem [resolvable:$true] %s574
      %577 = dma.vmem_to_hbm [thread:$0]  %s575, 32, %s4, [#allocation4]
    $region29: #{tpu_custom_call.1} parent=1 // pred_fallthru
      _
    // Predicated region
    $region30: #{tpu_custom_call.1} parent=1 // pred_check
      _
    $region31: #{tpu_custom_call.1} parent=1 // pred_check_branch
      %579 = sbr.rel (0) target = $region33
    $region32: #{tpu_custom_call.1} parent=1 // pred_region
      %580 = dma.done [#allocation4], 32
    $region33: #{tpu_custom_call.1} parent=1 // pred_fallthru
      _
    %581 = vsyncpa [#allocation3], 1
    %582 = vsyncpa [#allocation6], 1
    %583 = vsyncpa [#allocation4], 1

</llo_original>
